<compile_context>
chip_gen: v7x
topology: tpu7x:2x2x1
jax: 0.10.0
libtpu: 0.0.40
codegen_flags: <defaults>
</compile_context>

<pallas_src>
import functools

import jax
import jax.numpy as jnp
from jax.experimental import pallas as pl
from jax.experimental.pallas import tpu as pltpu


def _round_up(x, m):
    return ((x + m - 1) // m) * m


def _cdiv(a, b):
    return -(-a // b)


# ----------------------------------------------------------------------------------
# Pallas kernel: fused  [ im2col(sum_ic x) @ W ] + bias + squash(rotation dim)
# ----------------------------------------------------------------------------------
def _capsconv_squash_kernel(a_ref, w_ref, b_ref, g_ref, o_ref):
    # Conv matmul.  Routing weights are provably 1.0 and the in_caps sum was hoisted in front
    # of im2col in the wrapper, so a single bf16 matmul (f32 accumulation) produces s_j.
    s = jnp.dot(a_ref[...], w_ref[...], preferred_element_type=jnp.float32) + b_ref[...]

    # Squash over the rotation dim.  Columns are ordered (rotation, out_channel); g_ref is a
    # 0/1 (bf16, exact) matrix whose single lane-dense MXU matmul sums the squares over the 4
    # rotation columns of each output channel and broadcasts the result back to every column.
    x2 = (s * s).astype(jnp.bfloat16)
    nsq = jnp.dot(x2, g_ref[...], preferred_element_type=jnp.float32)
    norm = jnp.sqrt(nsq)
    # scale = nsq / (1 + nsq) / (norm + eps): one EUP sqrt + one approx EUP reciprocal.
    scale = nsq * pl.reciprocal((1.0 + nsq) * (norm + 1e-8), approx=True)
    o_ref[...] = (s * scale).astype(o_ref.dtype)


def capsconv_squash(a, wmat, bias_row, gmat, *, tm=4096):
    """a: (M2, K) bf16 im2col of the in_caps-summed input; wmat: (K, Npad) bf16;
    bias_row: (1, Npad) f32 (pre-scaled by in_caps); gmat: (Npad, Npad) bf16 0/1 group-sum.
    Returns (m_pad, Npad) bf16 (caller slices off padding)."""
    M2, K = a.shape
    n_pad = wmat.shape[1]

    # Near-equal M tiles (avoids a whole wasted padded tile); >= 2 tiles for v7x megacore when
    # worthwhile; tm_eff a multiple of 16 so bf16 blocks stay sublane-tile aligned.
    n_tiles = max(1, _cdiv(M2, tm))
    if n_tiles == 1 and M2 >= 1024:
        n_tiles = 2
    tm_eff = _round_up(_cdiv(M2, n_tiles), 16)
    m_pad = tm_eff * n_tiles
    if m_pad != M2:
        a = jnp.pad(a, ((0, m_pad - M2), (0, 0)))

    # VMEM budget: double-buffered A (lane-padded K) + double-buffered bf16 out + resident
    # weight / bias / group matrix.  Raise the scoped limit past v5e's 16 MiB default when
    # needed; cap well under v7x's 64 MiB physical.
    k_lanes = _round_up(K, 128)
    vmem_bytes = (2 * tm_eff * k_lanes * 2 + 2 * tm_eff * n_pad * 2
                  + k_lanes * n_pad * 2 + n_pad * n_pad * 2 + 8 * n_pad * 4)
    vmem_limit = int(min(max(2 * vmem_bytes, 16 << 20), 48 << 20))

    return pl.pallas_call(
        _capsconv_squash_kernel,
        out_shape=jax.ShapeDtypeStruct((m_pad, n_pad), jnp.bfloat16),
        grid=(n_tiles,),
        in_specs=[
            pl.BlockSpec((tm_eff, K), lambda i: (i, 0)),     # K=144: full-extent block (allowed)
            pl.BlockSpec((K, n_pad), lambda i: (0, 0)),
            pl.BlockSpec((1, n_pad), lambda i: (0, 0)),
            pl.BlockSpec((n_pad, n_pad), lambda i: (0, 0)),
        ],
        out_specs=pl.BlockSpec((tm_eff, n_pad), lambda i: (i, 0)),
        compiler_params=pltpu.CompilerParams(
            dimension_semantics=("parallel",),
            vmem_limit_bytes=vmem_limit),
    )(a, wmat, bias_row, gmat)


# ----------------------------------------------------------------------------------
# Glue: P4 filter transform, weight matrix, im2col (channel-last, no big transposes)
# ----------------------------------------------------------------------------------
def p4_transform_filter(w):
    # w: (Cout, Cin, 4, k, k) -> (Cout, 4, Cin, 4, k, k)
    # tw[co, s, ci, r] = rot90(w[co, ci, (r - s) % 4], k=s)
    parts = []
    for s in range(4):
        wr = jnp.roll(w, shift=s, axis=2)
        wr = jnp.rot90(wr, k=s, axes=(-2, -1))
        parts.append(wr)
    return jnp.stack(parts, axis=1)


def _build_weight_matrix(w, in_dim, ks):
    """(K, N) weight matrix; K order = (kh, kw, cin, r), output column order = (rotation, cout)."""
    rot = 4
    cout = w.shape[0]
    tw = p4_transform_filter(w)                                      # (cout, 4, cin, 4, k, k)
    tw = jnp.transpose(tw, (1, 0, 2, 3, 4, 5)).reshape(rot * cout, in_dim * rot, ks, ks)
    return jnp.transpose(tw, (2, 3, 1, 0)).reshape(ks * ks * in_dim * rot, rot * cout)


def im2col_nhwc(x, ks, stride, padding):
    # x: (N, C, H, W) -> (N*Ho*Wo, ks*ks*C); K order = (kh, kw, c); rows ordered (n, ho, wo).
    # TODO(synk): fuse im2col into the Pallas kernel (manual DMA of rows+halo, in-VMEM patch
    # assembly) to remove the HBM write + re-read of the k^2-inflated A buffer.
    N, C, H, W = x.shape
    Ho = (H + 2 * padding - ks) // stride + 1
    Wo = (W + 2 * padding - ks) // stride + 1
    xp = jnp.pad(x, ((0, 0), (0, 0), (padding, padding), (padding, padding)))
    xp = jnp.transpose(xp, (0, 2, 3, 1))  # (N, Hp, Wp, C), small (un-inflated) transpose
    cols = []
    for kh in range(ks):
        for kw in range(ks):
            cols.append(xp[:, kh:kh + stride * Ho:stride, kw:kw + stride * Wo:stride, :])
    a = jnp.stack(cols, axis=3)  # (N, Ho, Wo, ks*ks, C)
    return a.reshape(N * Ho * Wo, ks * ks * C), Ho, Wo


# ----------------------------------------------------------------------------------
# Faithful (reference) path: per-capsule conv + full wl_routing in plain JAX
# ----------------------------------------------------------------------------------
def _reference_forward(x, params, *, in_caps, in_dim, out_caps, out_dim,
                       kernel_size, stride=1, padding=0, k=10, ITER=2):
    w, b = params["w"], params["b"]
    gamma, beta = params["gamma"], params["beta"]
    B = x.shape[0]
    rot = 4
    wmat = _build_weight_matrix(w, in_dim, kernel_size)
    xt = jnp.transpose(x, (1, 0, 2, 3, 4, 5)).reshape(
        in_caps * B, in_dim * rot, x.shape[-2], x.shape[-1])
    a, Hc, Wc = im2col_nhwc(xt, kernel_size, stride, padding)
    # Same bf16 quantization of the conv operands as the Pallas path, f32 accumulation.
    a = a.astype(jnp.bfloat16).astype(jnp.float32)
    wm = wmat.astype(jnp.bfloat16).astype(jnp.float32)
    pred = a @ wm + jnp.tile(b, rot)[None, :]                        # (ic*B*Hc*Wc, rot*cout)
    pred = pred.reshape(in_caps, B, Hc, Wc, rot, out_caps, out_dim)
    predictions = jnp.transpose(pred, (1, 0, 5, 6, 4, 2, 3))         # (B, ic, oc, od, 4, H, W)

    # wl_routing (dead compute: softmax over a size-1 axis -> all ones; kept for faithfulness).
    p = jnp.transpose(predictions, (0, 2, 4, 5, 6, 1, 3))            # (B, oc, 4, H, W, ic, od)
    mu = jnp.mean(p, axis=-1, keepdims=True)
    var = jnp.mean((p - mu) ** 2, axis=-1, keepdims=True)
    pn = (p - mu) / jnp.sqrt(var + 1e-5) * gamma + beta
    dot = jnp.matmul(pn, jnp.swapaxes(pn, -1, -2))
    norm_sq = jnp.maximum(jnp.sum(pn * pn, axis=-1, keepdims=True), 1e-8)
    sim = dot / norm_sq
    ws = jnp.sum(sim, axis=-1, keepdims=True)                        # (..., ic, 1)
    idx = jnp.swapaxes(jax.lax.top_k(sim, k)[1], -1, -2)             # (..., k, ic)
    for _ in range(ITER):
        ws_rep = jnp.repeat(ws, in_caps, axis=-1)
        sel = jnp.take_along_axis(ws_rep, idx, axis=-2)
        ws = jnp.swapaxes(jnp.mean(sel, axis=-2, keepdims=True), -1, -2)
    ws = jax.nn.softmax(ws, axis=-1)                                 # size-1 axis -> all ones
    ws = jnp.transpose(ws, (0, 5, 1, 6, 2, 3, 4))                    # (B, ic, oc, 1, 4, H, W)

    s_j = jnp.sum(ws * predictions, axis=1)                          # (B, oc, od, 4, H, W)
    norm = jnp.sqrt(jnp.sum(s_j * s_j, axis=3, keepdims=True))
    scale = norm ** 2 / (1.0 + norm ** 2) / (norm + 1e-8)
    v = scale * s_j
    if out_caps == 1:
        v = jnp.squeeze(v, axis=1)
    return v


# ----------------------------------------------------------------------------------
# Fast forward pass (Pallas)
# ----------------------------------------------------------------------------------
def convolutional_capsules_forward(x, params, *, in_caps, in_dim, out_caps, out_dim,
                                   kernel_size, stride=1, padding=0, k=10, ITER=2,
                                   tm=4096, faithful_routing=False):
    if faithful_routing:
        # Full (dead) routing-weight computation; top-k / gather have no Pallas TPU primitive.
        return _reference_forward(x, params, in_caps=in_caps, in_dim=in_dim,
                                  out_caps=out_caps, out_dim=out_dim, kernel_size=kernel_size,
                                  stride=stride, padding=padding, k=k, ITER=ITER)

    w, b = params["w"], params["b"]
    B = x.shape[0]
    rot = 4
    cout = out_caps * out_dim
    n_cols = rot * cout
    n_pad = _round_up(n_cols, 128)

    # NOTE: the shortcut below relies on wl_routing's softmax running over a keepdim size-1
    # axis (torch.sum(..., keepdim=True)), making every routing weight exactly 1.0 regardless
    # of capsule counts.  The in_caps sum is hoisted in front of the (linear, shared) conv:
    #   sum_ic conv(x[:, ic]) == conv(sum_ic x[:, ic])          (sum done in f32, then bf16).
    x_sum = jnp.sum(x.astype(jnp.float32), axis=1)                   # (B, in_dim, 4, H, W)
    x_sum = x_sum.reshape(B, in_dim * rot, x.shape[-2], x.shape[-1])

    wmat = _build_weight_matrix(w, in_dim, kernel_size)              # (K, n_cols)
    a, Hc, Wc = im2col_nhwc(x_sum, kernel_size, stride, padding)     # (B*Hc*Wc, K)
    M2 = a.shape[0]
    a = a.astype(jnp.bfloat16)

    wmat = jnp.pad(wmat, ((0, 0), (0, n_pad - n_cols))).astype(jnp.bfloat16)
    # Routing weights == 1 -> the in_caps sum multiplies the per-capsule bias by in_caps.
    bias_row = jnp.pad(jnp.tile(b, rot) * float(in_caps), (0, n_pad - n_cols))
    bias_row = bias_row[None, :].astype(jnp.float32)

    # Rotation-group-sum matrix: G[i, j] = 1 iff columns i, j belong to the same output channel
    # (same index mod cout) and are real (un-padded) columns.  0/1 is exact in bf16.
    col = jnp.arange(n_pad)
    valid = col < n_cols
    gmat = ((col[:, None] % cout == col[None, :] % cout)
            & valid[:, None] & valid[None, :]).astype(jnp.bfloat16)

    v = capsconv_squash(a, wmat, bias_row, gmat, tm=tm)              # (m_pad, n_pad) bf16
    v = v[:M2, :n_cols].reshape(B, Hc, Wc, rot, out_caps, out_dim)
    # TODO(synk): transpose the tile in-kernel (XLU slot) and emit (channels, hw) blocks in the
    # consumer layout to remove this final HBM round trip; for now it is a single fused XLA
    # copy that reads bf16 and writes the f32 module output.
    v = jnp.transpose(v, (0, 4, 5, 3, 1, 2)).astype(jnp.float32)     # (B, oc, od, 4, H, W)
    if out_caps == 1:                                                # torch .squeeze(dim=1)
        v = jnp.squeeze(v, axis=1)
    return v


if __name__ == "__main__":
    # Small shapes consistent with the module's forward (B, in_caps, in_dim, 4, H, W).
    B, in_caps, in_dim = 2, 8, 4
    out_caps, out_dim = 2, 8
    ks, stride, padding = 3, 1, 1
    H = W = 8
    k_nn, ITER = 4, 2          # k must be <= in_caps (top-k over in_caps)

    key = jax.random.PRNGKey(0)
    kx, kw, kb = jax.random.split(key, 3)
    x = jax.random.normal(kx, (B, in_caps, in_dim, 4, H, W), jnp.float32)
    params = {
        # P4ConvP4 weight: (out_channels, in_channels, 4, k, k); deterministic init.
        "w": jax.random.normal(kw, (out_caps * out_dim, in_dim, 4, ks, ks), jnp.float32) * 0.1,
        "b": jax.random.normal(kb, (out_caps * out_dim,), jnp.float32) * 0.01,
        # nn.LayerNorm(out_dim) default init (only used by the faithful/reference path).
        "gamma": jnp.ones((out_dim,), jnp.float32),
        "beta": jnp.zeros((out_dim,), jnp.float32),
    }

    fwd = jax.jit(functools.partial(
        convolutional_capsules_forward,
        in_caps=in_caps, in_dim=in_dim, out_caps=out_caps, out_dim=out_dim,
        kernel_size=ks, stride=stride, padding=padding, k=k_nn, ITER=ITER))
    out = fwd(x, params)
    jax.block_until_ready(out)
    assert out.shape == (B, out_caps, out_dim, 4, H, W), out.shape
    assert bool(jnp.all(jnp.isfinite(out)))

    # Cross-check against the faithful pure-JAX path (per-capsule conv, full wl_routing, f32
    # squash).  Differences: bf16 operands, bf16 group-sum matmul, approx reciprocal, bf16 out.
    ref = _reference_forward(x, params, in_caps=in_caps, in_dim=in_dim,
                             out_caps=out_caps, out_dim=out_dim, kernel_size=ks,
                             stride=stride, padding=padding, k=k_nn, ITER=ITER)
    jax.block_until_ready(ref)
    err = float(jnp.max(jnp.abs(out - ref)))
    assert err < 3e-2, f"max abs diff vs reference = {err}"
    print("KERNEL_OK")
</pallas_src>

<mosaic_0001>
module attributes {stable_mosaic.version = 11 : i64} {
  func.func @_capsconv_squash_kernel(%arg0: i32, %arg1: memref<128x144xbf16, #tpu.memory_space<vmem>>, %arg2: memref<144x128xbf16, #tpu.memory_space<vmem>>, %arg3: memref<1x128xf32, #tpu.memory_space<vmem>>, %arg4: memref<128x128xbf16, #tpu.memory_space<vmem>>, %arg5: memref<128x128xbf16, #tpu.memory_space<vmem>>) attributes {dimension_semantics = [#tpu.dimension_semantics<parallel>], iteration_bounds = array<i64: 1>, scalar_prefetch = 0 : i64, scratch_operands = 0 : i64, tpu.core_type = #tpu.core_type<tc>, window_params = [{transform_indices = @transform_0, window_bounds = array<i64: 128, 144>}, {pipeline_mode = #tpu.pipeline_mode<synchronous>, transform_indices = @transform_1, window_bounds = array<i64: 144, 128>}, {pipeline_mode = #tpu.pipeline_mode<synchronous>, transform_indices = @transform_2, window_bounds = array<i64: 1, 128>}, {pipeline_mode = #tpu.pipeline_mode<synchronous>, transform_indices = @transform_3, window_bounds = array<i64: 128, 128>}, {transform_indices = @transform_4, window_bounds = array<i64: 128, 128>}]} {
    %c0 = arith.constant 0 : index
    %c0_0 = arith.constant 0 : index
    %0 = vector.load %arg1[%c0, %c0_0] : memref<128x144xbf16, #tpu.memory_space<vmem>>, vector<128x144xbf16>
    %c0_1 = arith.constant 0 : index
    %c0_2 = arith.constant 0 : index
    %1 = vector.load %arg2[%c0_1, %c0_2] : memref<144x128xbf16, #tpu.memory_space<vmem>>, vector<144x128xbf16>
    %cst = arith.constant dense<0.000000e+00> : vector<128x128xf32>
    %2 = tpu.matmul %0, %1, %cst {dimension_numbers = #tpu.dot_dimension_numbers<[1], [0], [0], [1], [0, 0, 1, 1], [], []>} : vector<128x144xbf16>, vector<144x128xbf16>, vector<128x128xf32> -> vector<128x128xf32>
    %c0_3 = arith.constant 0 : index
    %c0_4 = arith.constant 0 : index
    %3 = vector.load %arg3[%c0_3, %c0_4] : memref<1x128xf32, #tpu.memory_space<vmem>>, vector<1x128xf32>
    %4 = vector.broadcast %3 : vector<1x128xf32> to vector<128x128xf32>
    %5 = arith.addf %2, %4 : vector<128x128xf32>
    %6 = arith.mulf %5, %5 : vector<128x128xf32>
    %7 = arith.truncf %6 : vector<128x128xf32> to vector<128x128xbf16>
    %c0_5 = arith.constant 0 : index
    %c0_6 = arith.constant 0 : index
    %8 = vector.load %arg4[%c0_5, %c0_6] : memref<128x128xbf16, #tpu.memory_space<vmem>>, vector<128x128xbf16>
    %cst_7 = arith.constant dense<0.000000e+00> : vector<128x128xf32>
    %9 = tpu.matmul %7, %8, %cst_7 {dimension_numbers = #tpu.dot_dimension_numbers<[1], [0], [0], [1], [0, 0, 1, 1], [], []>} : vector<128x128xbf16>, vector<128x128xbf16>, vector<128x128xf32> -> vector<128x128xf32>
    %10 = math.sqrt %9 : vector<128x128xf32>
    %cst_8 = arith.constant 1.000000e+00 : f32
    %11 = vector.broadcast %cst_8 : f32 to vector<128x128xf32>
    %12 = arith.addf %11, %9 : vector<128x128xf32>
    %cst_9 = arith.constant 9.99999993E-9 : f32
    %13 = vector.broadcast %cst_9 : f32 to vector<128x128xf32>
    %14 = arith.addf %10, %13 : vector<128x128xf32>
    %15 = arith.mulf %12, %14 : vector<128x128xf32>
    %16 = tpu.reciprocal %15 {approx = true} : vector<128x128xf32> -> vector<128x128xf32>
    %17 = arith.mulf %9, %16 : vector<128x128xf32>
    %18 = arith.mulf %5, %17 : vector<128x128xf32>
    %19 = arith.truncf %18 : vector<128x128xf32> to vector<128x128xbf16>
    %c0_10 = arith.constant 0 : index
    %c0_11 = arith.constant 0 : index
    %20 = vector.load %arg5[%c0_10, %c0_11] : memref<128x128xbf16, #tpu.memory_space<vmem>>, vector<128x128xbf16>
    tpu.vector_store %arg5[%c0_10, %c0_11], %19 {strides = array<i32>} : memref<128x128xbf16, #tpu.memory_space<vmem>>, vector<128x128xbf16>,
    return
  }
  func.func @transform_0(%arg0: i32) -> (i32, i32) {
    %c0_i32 = arith.constant 0 : i32
    %c0_i32_0 = arith.constant 0 : i32
    return %arg0, %c0_i32 : i32, i32
  }
  func.func @transform_1(%arg0: i32) -> (i32, i32) {
    %c0_i32 = arith.constant 0 : i32
    %c0_i32_0 = arith.constant 0 : i32
    %c0_i32_1 = arith.constant 0 : i32
    return %c0_i32, %c0_i32_0 : i32, i32
  }
  func.func @transform_2(%arg0: i32) -> (i32, i32) {
    %c0_i32 = arith.constant 0 : i32
    %c0_i32_0 = arith.constant 0 : i32
    %c0_i32_1 = arith.constant 0 : i32
    return %c0_i32, %c0_i32_0 : i32, i32
  }
  func.func @transform_3(%arg0: i32) -> (i32, i32) {
    %c0_i32 = arith.constant 0 : i32
    %c0_i32_0 = arith.constant 0 : i32
    %c0_i32_1 = arith.constant 0 : i32
    return %c0_i32, %c0_i32_0 : i32, i32
  }
  func.func @transform_4(%arg0: i32) -> (i32, i32) {
    %c0_i32 = arith.constant 0 : i32
    %c0_i32_0 = arith.constant 0 : i32
    return %arg0, %c0_i32 : i32, i32
  }
}

</mosaic_0001>

<llo_original>
// kernel: convolutional_capsules_forward.1
$region0: #{convolutional_capsules_forward.1}
  #allocation0 [shape = 'u32[]', space=smem, size = 0x4, offset = 0x4, fixed_abs, tag = 'smem constant byte address 0x4 - core index']
  #allocation1 [shape = 'u32[144,128]{1,0:T(1,128)}', space=vmem, size = 0x12000, scoped, tag = 'internal scratch']
  %s0 = inlined_call_operand.vmem [shape: bf16[128,144], index: 0, kind: input, shape index: {}]
  %s1 = inlined_call_operand.vmem [shape: bf16[144,128], index: 1, kind: input, shape index: {}]
  %s2 = inlined_call_operand.vmem [shape: f32[1,128], index: 2, kind: input, shape index: {}]
  %s3 = inlined_call_operand.vmem [shape: bf16[128,128], index: 3, kind: input, shape index: {}]
  %s4 = inlined_call_operand.vmem [shape: bf16[128,128], index: 4, kind: output, shape index: {}]
  %s5 = sld [smem:[#allocation0]]
  $region26: #{convolutional_capsules_forward.1} parent=0
    _
  %s7 = ssub.s32 1, %s5
  %s8 = scalar_select 0, %s7, %s5
  // Predicated region
  $region2: #{convolutional_capsules_forward.1} parent=0 // pred_check
    _
  $region3: #{convolutional_capsules_forward.1} parent=0 // pred_check_branch
    %10 = sbr.rel (0) target = $region5
  $region4: #{convolutional_capsules_forward.1} parent=0 // pred_region
    _
  $region5: #{convolutional_capsules_forward.1} parent=0 // pred_fallthru
    _
  // Predicated region
  $region6: #{convolutional_capsules_forward.1} parent=0 // pred_check
    _
  $region7: #{convolutional_capsules_forward.1} parent=0 // pred_check_branch
    %12 = sbr.rel (0) target = $region9
  $region8: #{convolutional_capsules_forward.1} parent=0 // pred_region
    _
  $region9: #{convolutional_capsules_forward.1} parent=0 // pred_fallthru
    _
  // Predicated region
  $region10: #{convolutional_capsules_forward.1} parent=0 // pred_check
    _
  $region11: #{convolutional_capsules_forward.1} parent=0 // pred_check_branch
    %14 = sbr.rel (0) target = $region13
  $region12: #{convolutional_capsules_forward.1} parent=0 // pred_region
    _
  $region13: #{convolutional_capsules_forward.1} parent=0 // pred_fallthru
    _
  // Predicated region
  $region14: #{convolutional_capsules_forward.1} parent=0 // pred_check
    _
  $region15: #{convolutional_capsules_forward.1} parent=0 // pred_check_branch
    %16 = sbr.rel (0) target = $region17
  $region16: #{convolutional_capsules_forward.1} parent=0 // pred_region
    _
  $region17: #{convolutional_capsules_forward.1} parent=0 // pred_fallthru
    _
  %v18 = vld [vmem:[%s0] sm:$0xff]
  %v19 = vld [vmem:[%s0 + $0x8] sm:$0xff]
  %v20 = vld [vmem:[%s0 + $0x10] sm:$0xff]
  %v21 = vld [vmem:[%s0 + $0x18] sm:$0xff]
  %v22 = vld [vmem:[%s0 + $0x20] sm:$0xff]
  %v23 = vld [vmem:[%s0 + $0x28] sm:$0xff]
  %v24 = vld [vmem:[%s0 + $0x30] sm:$0xff]
  %v25 = vld [vmem:[%s0 + $0x38] sm:$0xff]
  %v26 = vld [vmem:[%s0 + $0x40] sm:$0xff]
  %v27 = vld [vmem:[%s0 + $0x48] sm:$0xff]
  %v28 = vld [vmem:[%s0 + $0x50] sm:$0xff]
  %v29 = vld [vmem:[%s0 + $0x58] sm:$0xff]
  %v30 = vld [vmem:[%s0 + $0x60] sm:$0xff]
  %v31 = vld [vmem:[%s0 + $0x68] sm:$0xff]
  %v32 = vld [vmem:[%s0 + $0x70] sm:$0xff]
  %v33 = vld [vmem:[%s0 + $0x78] sm:$0xff]
  %v34 = vld [vmem:[%s1] sm:$0xf]
  %v35 = vld [vmem:[%s1 + $0x4] sm:$0xf]
  %v36 = vld [vmem:[%s1 + $0x8] sm:$0xf]
  %v37 = vld [vmem:[%s1 + $0xc] sm:$0xf]
  %v38 = vld [vmem:[%s1 + $0x10] sm:$0xf]
  %v39 = vld [vmem:[%s1 + $0x14] sm:$0xf]
  %v40 = vld [vmem:[%s1 + $0x18] sm:$0xf]
  %v41 = vld [vmem:[%s1 + $0x1c] sm:$0xf]
  %v42 = vld [vmem:[%s1 + $0x20] sm:$0xf]
  %v43 = vld [vmem:[%s1 + $0x24] sm:$0xf]
  %v44 = vld [vmem:[%s1 + $0x28] sm:$0xf]
  %v45 = vld [vmem:[%s1 + $0x2c] sm:$0xf]
  %v46 = vld [vmem:[%s1 + $0x30] sm:$0xf]
  %v47 = vld [vmem:[%s1 + $0x34] sm:$0xf]
  %v48 = vld [vmem:[%s1 + $0x38] sm:$0xf]
  %v49 = vld [vmem:[%s1 + $0x3c] sm:$0xf]
  %v50 = vld [vmem:[%s1 + $0x40] sm:$0xf]
  %v51 = vld [vmem:[%s1 + $0x44] sm:$0xf]
  %v52 = vld [vmem:[%s2] sm:$0x1]
  %v54 = vlaneseq
  %v55 = vshrl.u32 %v54, 7
  %v56 = vsub.s32 0, %v55
  %v57 = vrot.slane %v52, %v56
  %v75 = vunpack.c.l.b16 %v18
  %v76 = vunpack.c.h.b16 %v18
  %v77 = vunpack.c.l.b16 %v19
  %v78 = vunpack.c.h.b16 %v19
  %v79 = vunpack.c.l.b16 %v20
  %v80 = vunpack.c.h.b16 %v20
  %v81 = vunpack.c.l.b16 %v21
  %v82 = vunpack.c.h.b16 %v21
  %v83 = vunpack.c.l.b16 %v22
  %v84 = vunpack.c.h.b16 %v22
  %v85 = vunpack.c.l.b16 %v23
  %v86 = vunpack.c.h.b16 %v23
  %v87 = vunpack.c.l.b16 %v24
  %v88 = vunpack.c.h.b16 %v24
  %v89 = vunpack.c.l.b16 %v25
  %v90 = vunpack.c.h.b16 %v25
  %v91 = vunpack.c.l.b16 %v26
  %v92 = vunpack.c.h.b16 %v26
  %v93 = vunpack.c.l.b16 %v27
  %v94 = vunpack.c.h.b16 %v27
  %v95 = vunpack.c.l.b16 %v28
  %v96 = vunpack.c.h.b16 %v28
  %v97 = vunpack.c.l.b16 %v29
  %v98 = vunpack.c.h.b16 %v29
  %v99 = vunpack.c.l.b16 %v30
  %v100 = vunpack.c.h.b16 %v30
  %v101 = vunpack.c.l.b16 %v31
  %v102 = vunpack.c.h.b16 %v31
  %v103 = vunpack.c.l.b16 %v32
  %v104 = vunpack.c.h.b16 %v32
  %v105 = vunpack.c.l.b16 %v33
  %v106 = vunpack.c.h.b16 %v33
  %v107 = vpack.c.b16 %v77, %v75
  %v108 = vpack.c.b16 %v78, %v76
  %v109 = vpack.c.b16 %v81, %v79
  %v110 = vpack.c.b16 %v82, %v80
  %v111 = vpack.c.b16 %v85, %v83
  %v112 = vpack.c.b16 %v86, %v84
  %v113 = vpack.c.b16 %v89, %v87
  %v114 = vpack.c.b16 %v90, %v88
  %v115 = vpack.c.b16 %v93, %v91
  %v116 = vpack.c.b16 %v94, %v92
  %v117 = vpack.c.b16 %v97, %v95
  %v118 = vpack.c.b16 %v98, %v96
  %v119 = vpack.c.b16 %v101, %v99
  %v120 = vpack.c.b16 %v102, %v100
  %v121 = vpack.c.b16 %v105, %v103
  %v122 = vpack.c.b16 %v106, %v104
  %v149 = vunpack.c.l.b16 %v34
  %v150 = vunpack.c.l.b16 %v35
  %v151 = vunpack.c.l.b16 %v36
  %v152 = vunpack.c.l.b16 %v37
  %v153 = vunpack.c.l.b16 %v38
  %v154 = vunpack.c.l.b16 %v39
  %v155 = vunpack.c.l.b16 %v40
  %v156 = vunpack.c.l.b16 %v41
  %v157 = vunpack.c.l.b16 %v42
  %v158 = vunpack.c.l.b16 %v43
  %v159 = vunpack.c.l.b16 %v44
  %v160 = vunpack.c.l.b16 %v45
  %v161 = vunpack.c.l.b16 %v46
  %v162 = vunpack.c.l.b16 %v47
  %v163 = vunpack.c.l.b16 %v48
  %v164 = vunpack.c.l.b16 %v49
  %v165 = vunpack.c.l.b16 %v50
  %v166 = vunpack.c.l.b16 %v51
  %v167 = vpack.c.b16 %v150, %v149
  %v168 = vpack.c.b16 %v152, %v151
  %v169 = vpack.c.b16 %v154, %v153
  %v170 = vpack.c.b16 %v156, %v155
  %v171 = vpack.c.b16 %v158, %v157
  %v172 = vpack.c.b16 %v160, %v159
  %v173 = vpack.c.b16 %v162, %v161
  %v174 = vpack.c.b16 %v164, %v163
  %v175 = vpack.c.b16 %v166, %v165
  %vm185 = vcmask 130048
  %v187 = vsel %vm185, %v108, 0
  %v190 = vsel %vm185, %v110, 0
  %v193 = vsel %vm185, %v112, 0
  %v196 = vsel %vm185, %v114, 0
  %v199 = vsel %vm185, %v116, 0
  %v202 = vsel %vm185, %v118, 0
  %v205 = vsel %vm185, %v120, 0
  %v208 = vsel %vm185, %v122, 0
  %210 = vmatprep.subr.bf16.mxu0 0
  %211 = vmatpush1.bf16.msra.mxu0 %v167
  %212 = vmatprep.subr.bf16.mxu0 0
  %213 = vmatpush1.bf16.msra.mxu0 %v168
  %214 = vmatprep.subr.bf16.mxu0 0
  %215 = vmatpush1.bf16.msra.mxu0 %v169
  %216 = vmatprep.subr.bf16.mxu0 0
  %217 = vmatpush1.bf16.msra.mxu0 %v170
  %218 = vmatprep.subr.bf16.mxu0 0
  %219 = vmatpush1.bf16.msra.mxu0 %v171
  %220 = vmatprep.subr.bf16.mxu0 0
  %221 = vmatpush1.bf16.msra.mxu0 %v172
  %222 = vmatprep.subr.bf16.mxu0 0
  %223 = vmatpush1.bf16.msra.mxu0 %v173
  %224 = vmatprep.subr.bf16.mxu0 0
  %225 = vmatpush1.bf16.msra.mxu0 %v174
  %226 = vmatprep.subr.bf16.mxu0 0
  %227 = vmatpush1.bf16.msra.mxu0 %v175
  %228 = vmatprep.subr.bf16.mxu0 0
  %229 = vmatpush1.bf16.msra.mxu0 0
  %230 = vmatprep.subr.bf16.mxu0 0
  %231 = vmatpush1.bf16.msra.mxu0 0
  %232 = vmatprep.subr.bf16.mxu0 0
  %233 = vmatpush1.bf16.msra.mxu0 0
  %234 = vmatprep.subr.bf16.mxu0 0
  %235 = vmatpush1.bf16.msra.mxu0 0
  %236 = vmatprep.subr.bf16.mxu0 0
  %237 = vmatpush1.bf16.msra.mxu0 0
  %238 = vmatprep.subr.bf16.mxu0 0
  %239 = vmatpush1.bf16.msra.mxu0 0
  %240 = vmatprep.subr.bf16.mxu0 0
  %241 = vmatpush1.bf16.msra.mxu0 0
  %242 = vmatprep.mubr.bf16.mxu0 %v187
  %243 = vmatmul.mubr.bf16.gmra.mrb[0].mxu0 %v107
  %v244 = vpop.f32.mrb[0].mxu0
  %v245 = vadd.f32 %v57, %v244
  %v246 = vpop.f32.mrb[0].mxu0
  %v247 = vpop.f32.mrb[0].mxu0
  %v248 = vadd.f32 %v57, %v247
  %v249 = vpop.f32.mrb[0].mxu0
  %250 = vmatprep.mubr.bf16.mxu0 %v190
  %251 = vmatmul.mubr.bf16.gmra.mrb[0].mxu0 %v109
  %v252 = vpop.f32.mrb[0].mxu0
  %v253 = vadd.f32 %v57, %v252
  %v254 = vpop.f32.mrb[0].mxu0
  %v255 = vpop.f32.mrb[0].mxu0
  %v256 = vadd.f32 %v57, %v255
  %v257 = vpop.f32.mrb[0].mxu0
  %258 = vmatprep.mubr.bf16.mxu0 %v193
  %259 = vmatmul.mubr.bf16.gmra.mrb[0].mxu0 %v111
  %v260 = vpop.f32.mrb[0].mxu0
  %v261 = vadd.f32 %v57, %v260
  %v262 = vpop.f32.mrb[0].mxu0
  %v263 = vpop.f32.mrb[0].mxu0
  %v264 = vadd.f32 %v57, %v263
  %v265 = vpop.f32.mrb[0].mxu0
  %266 = vmatprep.mubr.bf16.mxu0 %v196
  %267 = vmatmul.mubr.bf16.gmra.mrb[0].mxu0 %v113
  %v268 = vpop.f32.mrb[0].mxu0
  %v269 = vadd.f32 %v57, %v268
  %v270 = vpop.f32.mrb[0].mxu0
  %v271 = vpop.f32.mrb[0].mxu0
  %v272 = vadd.f32 %v57, %v271
  %v273 = vpop.f32.mrb[0].mxu0
  %274 = vmatprep.mubr.bf16.mxu0 %v199
  %275 = vmatmul.mubr.bf16.gmra.mrb[0].mxu0 %v115
  %v276 = vpop.f32.mrb[0].mxu0
  %v277 = vadd.f32 %v57, %v276
  %v278 = vpop.f32.mrb[0].mxu0
  %v279 = vpop.f32.mrb[0].mxu0
  %v280 = vadd.f32 %v57, %v279
  %v281 = vpop.f32.mrb[0].mxu0
  %282 = vmatprep.mubr.bf16.mxu0 %v202
  %283 = vmatmul.mubr.bf16.gmra.mrb[0].mxu0 %v117
  %v284 = vpop.f32.mrb[0].mxu0
  %v285 = vadd.f32 %v57, %v284
  %v286 = vpop.f32.mrb[0].mxu0
  %v287 = vpop.f32.mrb[0].mxu0
  %v288 = vadd.f32 %v57, %v287
  %v289 = vpop.f32.mrb[0].mxu0
  %290 = vmatprep.mubr.bf16.mxu0 %v205
  %291 = vmatmul.mubr.bf16.gmra.mrb[0].mxu0 %v119
  %v292 = vpop.f32.mrb[0].mxu0
  %v293 = vadd.f32 %v57, %v292
  %v294 = vpop.f32.mrb[0].mxu0
  %v295 = vpop.f32.mrb[0].mxu0
  %v296 = vadd.f32 %v57, %v295
  %v297 = vpop.f32.mrb[0].mxu0
  %298 = vmatprep.mubr.bf16.mxu0 %v208
  %299 = vmatmul.mubr.bf16.gmra.mrb[0].mxu0 %v121
  %v300 = vpop.f32.mrb[0].mxu0
  %v301 = vadd.f32 %v57, %v300
  %v302 = vpop.f32.mrb[0].mxu0
  %v303 = vpop.f32.mrb[0].mxu0
  %v304 = vadd.f32 %v57, %v303
  %v305 = vpop.f32.mrb[0].mxu0
  %306 = vdwg.mxu0
  %v307 = vmul.f32 %v245, %v245
  %v308 = vmul.f32 %v248, %v248
  %v309 = vmul.f32 %v253, %v253
  %v310 = vmul.f32 %v256, %v256
  %v311 = vmul.f32 %v261, %v261
  %v312 = vmul.f32 %v264, %v264
  %v313 = vmul.f32 %v269, %v269
  %v314 = vmul.f32 %v272, %v272
  %v315 = vmul.f32 %v277, %v277
  %v316 = vmul.f32 %v280, %v280
  %v317 = vmul.f32 %v285, %v285
  %v318 = vmul.f32 %v288, %v288
  %v319 = vmul.f32 %v293, %v293
  %v320 = vmul.f32 %v296, %v296
  %v321 = vmul.f32 %v301, %v301
  %v322 = vmul.f32 %v304, %v304
  %v323 = vpack.c.bf16 %v308, %v307
  %v324 = vpack.c.bf16 %v310, %v309
  %v325 = vpack.c.bf16 %v312, %v311
  %v326 = vpack.c.bf16 %v314, %v313
  %v327 = vpack.c.bf16 %v316, %v315
  %v328 = vpack.c.bf16 %v318, %v317
  %v329 = vpack.c.bf16 %v320, %v319
  %v330 = vpack.c.bf16 %v322, %v321
  %v331 = vld [vmem:[%s3] sm:$0xf]
  %v332 = vld [vmem:[%s3 + $0x4] sm:$0xf]
  %v333 = vld [vmem:[%s3 + $0x8] sm:$0xf]
  %v334 = vld [vmem:[%s3 + $0xc] sm:$0xf]
  %v335 = vld [vmem:[%s3 + $0x10] sm:$0xf]
  %v336 = vld [vmem:[%s3 + $0x14] sm:$0xf]
  %v337 = vld [vmem:[%s3 + $0x18] sm:$0xf]
  %v338 = vld [vmem:[%s3 + $0x1c] sm:$0xf]
  %v339 = vld [vmem:[%s3 + $0x20] sm:$0xf]
  %v340 = vld [vmem:[%s3 + $0x24] sm:$0xf]
  %v341 = vld [vmem:[%s3 + $0x28] sm:$0xf]
  %v342 = vld [vmem:[%s3 + $0x2c] sm:$0xf]
  %v343 = vld [vmem:[%s3 + $0x30] sm:$0xf]
  %v344 = vld [vmem:[%s3 + $0x34] sm:$0xf]
  %v345 = vld [vmem:[%s3 + $0x38] sm:$0xf]
  %v346 = vld [vmem:[%s3 + $0x3c] sm:$0xf]
  %v363 = vunpack.c.l.b16 %v331
  %v364 = vunpack.c.l.b16 %v332
  %v365 = vunpack.c.l.b16 %v333
  %v366 = vunpack.c.l.b16 %v334
  %v367 = vunpack.c.l.b16 %v335
  %v368 = vunpack.c.l.b16 %v336
  %v369 = vunpack.c.l.b16 %v337
  %v370 = vunpack.c.l.b16 %v338
  %v371 = vunpack.c.l.b16 %v339
  %v372 = vunpack.c.l.b16 %v340
  %v373 = vunpack.c.l.b16 %v341
  %v374 = vunpack.c.l.b16 %v342
  %v375 = vunpack.c.l.b16 %v343
  %v376 = vunpack.c.l.b16 %v344
  %v377 = vunpack.c.l.b16 %v345
  %v378 = vunpack.c.l.b16 %v346
  %v379 = vpack.c.b16 %v364, %v363
  %v380 = vpack.c.b16 %v366, %v365
  %v381 = vpack.c.b16 %v368, %v367
  %v382 = vpack.c.b16 %v370, %v369
  %v383 = vpack.c.b16 %v372, %v371
  %v384 = vpack.c.b16 %v374, %v373
  %v385 = vpack.c.b16 %v376, %v375
  %v386 = vpack.c.b16 %v378, %v377
  %395 = vmatprep.subr.bf16.mxu0 0
  %396 = vmatpush1.bf16.msra.mxu0 %v379
  %397 = vmatprep.subr.bf16.mxu0 0
  %398 = vmatpush1.bf16.msra.mxu0 %v380
  %399 = vmatprep.subr.bf16.mxu0 0
  %400 = vmatpush1.bf16.msra.mxu0 %v381
  %401 = vmatprep.subr.bf16.mxu0 0
  %402 = vmatpush1.bf16.msra.mxu0 %v382
  %403 = vmatprep.subr.bf16.mxu0 0
  %404 = vmatpush1.bf16.msra.mxu0 %v383
  %405 = vmatprep.subr.bf16.mxu0 0
  %406 = vmatpush1.bf16.msra.mxu0 %v384
  %407 = vmatprep.subr.bf16.mxu0 0
  %408 = vmatpush1.bf16.msra.mxu0 %v385
  %409 = vmatprep.subr.bf16.mxu0 0
  %410 = vmatpush1.bf16.msra.mxu0 %v386
  %411 = vmatprep.subr.bf16.mxu0 0
  %412 = vmatpush1.bf16.msra.mxu0 0
  %413 = vmatprep.subr.bf16.mxu0 0
  %414 = vmatpush1.bf16.msra.mxu0 0
  %415 = vmatprep.subr.bf16.mxu0 0
  %416 = vmatpush1.bf16.msra.mxu0 0
  %417 = vmatprep.subr.bf16.mxu0 0
  %418 = vmatpush1.bf16.msra.mxu0 0
  %419 = vmatprep.subr.bf16.mxu0 0
  %420 = vmatpush1.bf16.msra.mxu0 0
  %421 = vmatprep.subr.bf16.mxu0 0
  %422 = vmatpush1.bf16.msra.mxu0 0
  %423 = vmatprep.subr.bf16.mxu0 0
  %424 = vmatpush1.bf16.msra.mxu0 0
  %425 = vmatprep.subr.bf16.mxu0 0
  %426 = vmatpush1.bf16.msra.mxu0 0
  %427 = vmatprep.mubr.bf16.mxu0 0
  %428 = vmatmul.mubr.bf16.gmra.mrb[0].mxu0 %v323
  %v429 = vpop.f32.mrb[0].mxu0
  %v430 = vadd.f32 0.0, %v429
  %v431 = vpop.f32.mrb[0].mxu0
  %v432 = vpop.f32.mrb[0].mxu0
  %v433 = vadd.f32 0.0, %v432
  %v434 = vpop.f32.mrb[0].mxu0
  %435 = vmatprep.mubr.bf16.mxu0 0
  %436 = vmatmul.mubr.bf16.gmra.mrb[0].mxu0 %v324
  %v437 = vpop.f32.mrb[0].mxu0
  %v438 = vadd.f32 0.0, %v437
  %v439 = vpop.f32.mrb[0].mxu0
  %v440 = vpop.f32.mrb[0].mxu0
  %v441 = vadd.f32 0.0, %v440
  %v442 = vpop.f32.mrb[0].mxu0
  %443 = vmatprep.mubr.bf16.mxu0 0
  %444 = vmatmul.mubr.bf16.gmra.mrb[0].mxu0 %v325
  %v445 = vpop.f32.mrb[0].mxu0
  %v446 = vadd.f32 0.0, %v445
  %v447 = vpop.f32.mrb[0].mxu0
  %v448 = vpop.f32.mrb[0].mxu0
  %v449 = vadd.f32 0.0, %v448
  %v450 = vpop.f32.mrb[0].mxu0
  %451 = vmatprep.mubr.bf16.mxu0 0
  %452 = vmatmul.mubr.bf16.gmra.mrb[0].mxu0 %v326
  %v453 = vpop.f32.mrb[0].mxu0
  %v454 = vadd.f32 0.0, %v453
  %v455 = vpop.f32.mrb[0].mxu0
  %v456 = vpop.f32.mrb[0].mxu0
  %v457 = vadd.f32 0.0, %v456
  %v458 = vpop.f32.mrb[0].mxu0
  %459 = vmatprep.mubr.bf16.mxu0 0
  %460 = vmatmul.mubr.bf16.gmra.mrb[0].mxu0 %v327
  %v461 = vpop.f32.mrb[0].mxu0
  %v462 = vadd.f32 0.0, %v461
  %v463 = vpop.f32.mrb[0].mxu0
  %v464 = vpop.f32.mrb[0].mxu0
  %v465 = vadd.f32 0.0, %v464
  %v466 = vpop.f32.mrb[0].mxu0
  %467 = vmatprep.mubr.bf16.mxu0 0
  %468 = vmatmul.mubr.bf16.gmra.mrb[0].mxu0 %v328
  %v469 = vpop.f32.mrb[0].mxu0
  %v470 = vadd.f32 0.0, %v469
  %v471 = vpop.f32.mrb[0].mxu0
  %v472 = vpop.f32.mrb[0].mxu0
  %v473 = vadd.f32 0.0, %v472
  %v474 = vpop.f32.mrb[0].mxu0
  %475 = vmatprep.mubr.bf16.mxu0 0
  %476 = vmatmul.mubr.bf16.gmra.mrb[0].mxu0 %v329
  %v477 = vpop.f32.mrb[0].mxu0
  %v478 = vadd.f32 0.0, %v477
  %v479 = vpop.f32.mrb[0].mxu0
  %v480 = vpop.f32.mrb[0].mxu0
  %v481 = vadd.f32 0.0, %v480
  %v482 = vpop.f32.mrb[0].mxu0
  %483 = vmatprep.mubr.bf16.mxu0 0
  %484 = vmatmul.mubr.bf16.gmra.mrb[0].mxu0 %v330
  %v485 = vpop.f32.mrb[0].mxu0
  %v486 = vadd.f32 0.0, %v485
  %v487 = vpop.f32.mrb[0].mxu0
  %v488 = vpop.f32.mrb[0].mxu0
  %v489 = vadd.f32 0.0, %v488
  %v490 = vpop.f32.mrb[0].mxu0
  %491 = vdwg.mxu0
  %v492 = vrsqrt.pop %v430
  %v493 = vmul.f32 %v430, %v492
  %vm494 = vcmp.eq.f32.partialorder %v430, inf
  %v495 = vsel %vm494, %v430, %v493
  %vm496 = vcmp.eq.f32.partialorder %v430, 0.0
  %v497 = vand.u32 %v430, 2147483648
  %v498 = vsel %vm496, %v497, %v495
  %v499 = vrsqrt.pop %v433
  %v500 = vmul.f32 %v433, %v499
  %vm501 = vcmp.eq.f32.partialorder %v433, inf
  %v502 = vsel %vm501, %v433, %v500
  %vm503 = vcmp.eq.f32.partialorder %v433, 0.0
  %v504 = vand.u32 %v433, 2147483648
  %v505 = vsel %vm503, %v504, %v502
  %v506 = vrsqrt.pop %v438
  %v507 = vmul.f32 %v438, %v506
  %vm508 = vcmp.eq.f32.partialorder %v438, inf
  %v509 = vsel %vm508, %v438, %v507
  %vm510 = vcmp.eq.f32.partialorder %v438, 0.0
  %v511 = vand.u32 %v438, 2147483648
  %v512 = vsel %vm510, %v511, %v509
  %v513 = vrsqrt.pop %v441
  %v514 = vmul.f32 %v441, %v513
  %vm515 = vcmp.eq.f32.partialorder %v441, inf
  %v516 = vsel %vm515, %v441, %v514
  %vm517 = vcmp.eq.f32.partialorder %v441, 0.0
  %v518 = vand.u32 %v441, 2147483648
  %v519 = vsel %vm517, %v518, %v516
  %v520 = vrsqrt.pop %v446
  %v521 = vmul.f32 %v446, %v520
  %vm522 = vcmp.eq.f32.partialorder %v446, inf
  %v523 = vsel %vm522, %v446, %v521
  %vm524 = vcmp.eq.f32.partialorder %v446, 0.0
  %v525 = vand.u32 %v446, 2147483648
  %v526 = vsel %vm524, %v525, %v523
  %v527 = vrsqrt.pop %v449
  %v528 = vmul.f32 %v449, %v527
  %vm529 = vcmp.eq.f32.partialorder %v449, inf
  %v530 = vsel %vm529, %v449, %v528
  %vm531 = vcmp.eq.f32.partialorder %v449, 0.0
  %v532 = vand.u32 %v449, 2147483648
  %v533 = vsel %vm531, %v532, %v530
  %v534 = vrsqrt.pop %v454
  %v535 = vmul.f32 %v454, %v534
  %vm536 = vcmp.eq.f32.partialorder %v454, inf
  %v537 = vsel %vm536, %v454, %v535
  %vm538 = vcmp.eq.f32.partialorder %v454, 0.0
  %v539 = vand.u32 %v454, 2147483648
  %v540 = vsel %vm538, %v539, %v537
  %v541 = vrsqrt.pop %v457
  %v542 = vmul.f32 %v457, %v541
  %vm543 = vcmp.eq.f32.partialorder %v457, inf
  %v544 = vsel %vm543, %v457, %v542
  %vm545 = vcmp.eq.f32.partialorder %v457, 0.0
  %v546 = vand.u32 %v457, 2147483648
  %v547 = vsel %vm545, %v546, %v544
  %v548 = vrsqrt.pop %v462
  %v549 = vmul.f32 %v462, %v548
  %vm550 = vcmp.eq.f32.partialorder %v462, inf
  %v551 = vsel %vm550, %v462, %v549
  %vm552 = vcmp.eq.f32.partialorder %v462, 0.0
  %v553 = vand.u32 %v462, 2147483648
  %v554 = vsel %vm552, %v553, %v551
  %v555 = vrsqrt.pop %v465
  %v556 = vmul.f32 %v465, %v555
  %vm557 = vcmp.eq.f32.partialorder %v465, inf
  %v558 = vsel %vm557, %v465, %v556
  %vm559 = vcmp.eq.f32.partialorder %v465, 0.0
  %v560 = vand.u32 %v465, 2147483648
  %v561 = vsel %vm559, %v560, %v558
  %v562 = vrsqrt.pop %v470
  %v563 = vmul.f32 %v470, %v562
  %vm564 = vcmp.eq.f32.partialorder %v470, inf
  %v565 = vsel %vm564, %v470, %v563
  %vm566 = vcmp.eq.f32.partialorder %v470, 0.0
  %v567 = vand.u32 %v470, 2147483648
  %v568 = vsel %vm566, %v567, %v565
  %v569 = vrsqrt.pop %v473
  %v570 = vmul.f32 %v473, %v569
  %vm571 = vcmp.eq.f32.partialorder %v473, inf
  %v572 = vsel %vm571, %v473, %v570
  %vm573 = vcmp.eq.f32.partialorder %v473, 0.0
  %v574 = vand.u32 %v473, 2147483648
  %v575 = vsel %vm573, %v574, %v572
  %v576 = vrsqrt.pop %v478
  %v577 = vmul.f32 %v478, %v576
  %vm578 = vcmp.eq.f32.partialorder %v478, inf
  %v579 = vsel %vm578, %v478, %v577
  %vm580 = vcmp.eq.f32.partialorder %v478, 0.0
  %v581 = vand.u32 %v478, 2147483648
  %v582 = vsel %vm580, %v581, %v579
  %v583 = vrsqrt.pop %v481
  %v584 = vmul.f32 %v481, %v583
  %vm585 = vcmp.eq.f32.partialorder %v481, inf
  %v586 = vsel %vm585, %v481, %v584
  %vm587 = vcmp.eq.f32.partialorder %v481, 0.0
  %v588 = vand.u32 %v481, 2147483648
  %v589 = vsel %vm587, %v588, %v586
  %v590 = vrsqrt.pop %v486
  %v591 = vmul.f32 %v486, %v590
  %vm592 = vcmp.eq.f32.partialorder %v486, inf
  %v593 = vsel %vm592, %v486, %v591
  %vm594 = vcmp.eq.f32.partialorder %v486, 0.0
  %v595 = vand.u32 %v486, 2147483648
  %v596 = vsel %vm594, %v595, %v593
  %v597 = vrsqrt.pop %v489
  %v598 = vmul.f32 %v489, %v597
  %vm599 = vcmp.eq.f32.partialorder %v489, inf
  %v600 = vsel %vm599, %v489, %v598
  %vm601 = vcmp.eq.f32.partialorder %v489, 0.0
  %v602 = vand.u32 %v489, 2147483648
  %v603 = vsel %vm601, %v602, %v600
  %v604 = vadd.f32 %v430, 1.0
  %v605 = vadd.f32 %v433, 1.0
  %v606 = vadd.f32 %v438, 1.0
  %v607 = vadd.f32 %v441, 1.0
  %v608 = vadd.f32 %v446, 1.0
  %v609 = vadd.f32 %v449, 1.0
  %v610 = vadd.f32 %v454, 1.0
  %v611 = vadd.f32 %v457, 1.0
  %v612 = vadd.f32 %v462, 1.0
  %v613 = vadd.f32 %v465, 1.0
  %v614 = vadd.f32 %v470, 1.0
  %v615 = vadd.f32 %v473, 1.0
  %v616 = vadd.f32 %v478, 1.0
  %v617 = vadd.f32 %v481, 1.0
  %v618 = vadd.f32 %v486, 1.0
  %v619 = vadd.f32 %v489, 1.0
  %v620 = vadd.f32 %v498, 1e-08
  %v621 = vadd.f32 %v505, 1e-08
  %v622 = vadd.f32 %v512, 1e-08
  %v623 = vadd.f32 %v519, 1e-08
  %v624 = vadd.f32 %v526, 1e-08
  %v625 = vadd.f32 %v533, 1e-08
  %v626 = vadd.f32 %v540, 1e-08
  %v627 = vadd.f32 %v547, 1e-08
  %v628 = vadd.f32 %v554, 1e-08
  %v629 = vadd.f32 %v561, 1e-08
  %v630 = vadd.f32 %v568, 1e-08
  %v631 = vadd.f32 %v575, 1e-08
  %v632 = vadd.f32 %v582, 1e-08
  %v633 = vadd.f32 %v589, 1e-08
  %v634 = vadd.f32 %v596, 1e-08
  %v635 = vadd.f32 %v603, 1e-08
  %v636 = vmul.f32 %v604, %v620
  %v637 = vmul.f32 %v605, %v621
  %v638 = vmul.f32 %v606, %v622
  %v639 = vmul.f32 %v607, %v623
  %v640 = vmul.f32 %v608, %v624
  %v641 = vmul.f32 %v609, %v625
  %v642 = vmul.f32 %v610, %v626
  %v643 = vmul.f32 %v611, %v627
  %v644 = vmul.f32 %v612, %v628
  %v645 = vmul.f32 %v613, %v629
  %v646 = vmul.f32 %v614, %v630
  %v647 = vmul.f32 %v615, %v631
  %v648 = vmul.f32 %v616, %v632
  %v649 = vmul.f32 %v617, %v633
  %v650 = vmul.f32 %v618, %v634
  %v651 = vmul.f32 %v619, %v635
  %v652 = vrcp.pop %v636
  %v653 = vrcp.pop %v637
  %v654 = vrcp.pop %v638
  %v655 = vrcp.pop %v639
  %v656 = vrcp.pop %v640
  %v657 = vrcp.pop %v641
  %v658 = vrcp.pop %v642
  %v659 = vrcp.pop %v643
  %v660 = vrcp.pop %v644
  %v661 = vrcp.pop %v645
  %v662 = vrcp.pop %v646
  %v663 = vrcp.pop %v647
  %v664 = vrcp.pop %v648
  %v665 = vrcp.pop %v649
  %v666 = vrcp.pop %v650
  %v667 = vrcp.pop %v651
  %v668 = vmul.f32 %v430, %v652
  %v669 = vmul.f32 %v433, %v653
  %v670 = vmul.f32 %v438, %v654
  %v671 = vmul.f32 %v441, %v655
  %v672 = vmul.f32 %v446, %v656
  %v673 = vmul.f32 %v449, %v657
  %v674 = vmul.f32 %v454, %v658
  %v675 = vmul.f32 %v457, %v659
  %v676 = vmul.f32 %v462, %v660
  %v677 = vmul.f32 %v465, %v661
  %v678 = vmul.f32 %v470, %v662
  %v679 = vmul.f32 %v473, %v663
  %v680 = vmul.f32 %v478, %v664
  %v681 = vmul.f32 %v481, %v665
  %v682 = vmul.f32 %v486, %v666
  %v683 = vmul.f32 %v489, %v667
  %v684 = vmul.f32 %v245, %v668
  %v685 = vmul.f32 %v248, %v669
  %v686 = vmul.f32 %v253, %v670
  %v687 = vmul.f32 %v256, %v671
  %v688 = vmul.f32 %v261, %v672
  %v689 = vmul.f32 %v264, %v673
  %v690 = vmul.f32 %v269, %v674
  %v691 = vmul.f32 %v272, %v675
  %v692 = vmul.f32 %v277, %v676
  %v693 = vmul.f32 %v280, %v677
  %v694 = vmul.f32 %v285, %v678
  %v695 = vmul.f32 %v288, %v679
  %v696 = vmul.f32 %v293, %v680
  %v697 = vmul.f32 %v296, %v681
  %v698 = vmul.f32 %v301, %v682
  %v699 = vmul.f32 %v304, %v683
  %v700 = vpack.c.bf16 %v685, %v684
  %v701 = vpack.c.bf16 %v687, %v686
  %v702 = vpack.c.bf16 %v689, %v688
  %v703 = vpack.c.bf16 %v691, %v690
  %v704 = vpack.c.bf16 %v693, %v692
  %v705 = vpack.c.bf16 %v695, %v694
  %v706 = vpack.c.bf16 %v697, %v696
  %v707 = vpack.c.bf16 %v699, %v698
  %v716 = vunpack.c.l.b16 %v700
  %v717 = vunpack.c.h.b16 %v700
  %v718 = vunpack.c.l.b16 %v701
  %v719 = vunpack.c.h.b16 %v701
  %v720 = vunpack.c.l.b16 %v702
  %v721 = vunpack.c.h.b16 %v702
  %v722 = vunpack.c.l.b16 %v703
  %v723 = vunpack.c.h.b16 %v703
  %v724 = vunpack.c.l.b16 %v704
  %v725 = vunpack.c.h.b16 %v704
  %v726 = vunpack.c.l.b16 %v705
  %v727 = vunpack.c.h.b16 %v705
  %v728 = vunpack.c.l.b16 %v706
  %v729 = vunpack.c.h.b16 %v706
  %v730 = vunpack.c.l.b16 %v707
  %v731 = vunpack.c.h.b16 %v707
  %v732 = vpack.c.b16 %v716, %v716
  %v733 = vpack.c.b16 %v717, %v717
  %v734 = vpack.c.b16 %v718, %v718
  %v735 = vpack.c.b16 %v719, %v719
  %v736 = vpack.c.b16 %v720, %v720
  %v737 = vpack.c.b16 %v721, %v721
  %v738 = vpack.c.b16 %v722, %v722
  %v739 = vpack.c.b16 %v723, %v723
  %v740 = vpack.c.b16 %v724, %v724
  %v741 = vpack.c.b16 %v725, %v725
  %v742 = vpack.c.b16 %v726, %v726
  %v743 = vpack.c.b16 %v727, %v727
  %v744 = vpack.c.b16 %v728, %v728
  %v745 = vpack.c.b16 %v729, %v729
  %v746 = vpack.c.b16 %v730, %v730
  %v747 = vpack.c.b16 %v731, %v731
  %764 = vst [vmem:[%s4] sm:$0xf] %v732
  %765 = vst [vmem:[%s4 + $0x4] sm:$0xf] %v733
  %766 = vst [vmem:[%s4 + $0x8] sm:$0xf] %v734
  %767 = vst [vmem:[%s4 + $0xc] sm:$0xf] %v735
  %768 = vst [vmem:[%s4 + $0x10] sm:$0xf] %v736
  %769 = vst [vmem:[%s4 + $0x14] sm:$0xf] %v737
  %770 = vst [vmem:[%s4 + $0x18] sm:$0xf] %v738
  %771 = vst [vmem:[%s4 + $0x1c] sm:$0xf] %v739
  %772 = vst [vmem:[%s4 + $0x20] sm:$0xf] %v740
  %773 = vst [vmem:[%s4 + $0x24] sm:$0xf] %v741
  %774 = vst [vmem:[%s4 + $0x28] sm:$0xf] %v742
  %775 = vst [vmem:[%s4 + $0x2c] sm:$0xf] %v743
  %776 = vst [vmem:[%s4 + $0x30] sm:$0xf] %v744
  %777 = vst [vmem:[%s4 + $0x34] sm:$0xf] %v745
  %778 = vst [vmem:[%s4 + $0x38] sm:$0xf] %v746
  %779 = vst [vmem:[%s4 + $0x3c] sm:$0xf] %v747
  // Predicated region
  $region18: #{convolutional_capsules_forward.1} parent=0 // pred_check
    _
  $region19: #{convolutional_capsules_forward.1} parent=0 // pred_check_branch
    %781 = sbr.rel (0) target = $region21
  $region20: #{convolutional_capsules_forward.1} parent=0 // pred_region
    _
  $region21: #{convolutional_capsules_forward.1} parent=0 // pred_fallthru
    _
  // Predicated region
  $region22: #{convolutional_capsules_forward.1} parent=0 // pred_check
    _
  $region23: #{convolutional_capsules_forward.1} parent=0 // pred_check_branch
    %783 = sbr.rel (0) target = $region25
  $region24: #{convolutional_capsules_forward.1} parent=0 // pred_region
    _
  $region25: #{convolutional_capsules_forward.1} parent=0 // pred_fallthru
    _

</llo_original>
